<compile_context>
chip_gen: v6e
topology: v6e:2x2x1
jax: 0.10.0
libtpu: 0.0.40
codegen_flags: <defaults>
</compile_context>

<pallas_src>
import math

import jax
import jax.numpy as jnp
from jax.experimental import pallas as pl
from jax.experimental.pallas import tpu as pltpu

HIDDEN = 100       # fixed by the module definition (w1: F x 100, w2: 100 x 1)
HIDDEN_PAD = 128   # hidden dim zero-padded to a full lane width


def _round_up(x, m):
    return ((x + m - 1) // m) * m


def _vmem_estimate_bytes(tm, f):
    """Rough VMEM footprint for one pipelined grid step (double buffers)."""
    lane_f = _round_up(f, 128)
    e_bufs = 2 * tm * lane_f * 4             # double-buffered E row tile
    out_bufs = 2 * (tm // 8) * 8 * 128 * 4   # (tm, 1) block, (8,128)-tiled, x2
    weights = _round_up(f, 8) * HIDDEN_PAD * 4 + 8 * HIDDEN_PAD * 4
    interm = 2 * tm * HIDDEN_PAD * 4         # h and h*w2 live values
    return e_bufs + out_bufs + weights + interm


def _choose_row_tile(n, f, tm_req, budget_bytes=24 * 2**20):
    """Largest row tile (multiple of 256) that fits a conservative VMEM budget
    on every generation (v7x has only 64 MiB physical VMEM per TensorCore)."""
    tm = max(256, (tm_req // 256) * 256)
    tm = min(tm, max(256, _round_up(n, 256)))   # don't over-pad tiny inputs
    while tm > 256 and _vmem_estimate_bytes(tm, f) > budget_bytes:
        tm -= 256
    return tm


def _drw_kernel(e_ref, w1_ref, w2_ref, o_ref):
    # e_ref : (tm, F)    row tile of E
    # w1_ref: (F, 128)   zero-padded first-layer weight (whole, VMEM-resident)
    # w2_ref: (1, 128)   zero-padded second-layer weight as a lane row
    # o_ref : (tm, 1)    output tile
    h = jnp.dot(e_ref[...], w1_ref[...], preferred_element_type=jnp.float32)
    h = jnp.maximum(h, 0.0)                                   # ReLU (VPU)
    # hidden -> 1 as broadcast multiply (VPU) + lane reduction (XLU); avoids a
    # 1-column MXU matmul and the awkward (100, 1) weight tile.
    o_ref[...] = jnp.sum(h * w2_ref[...], axis=-1, keepdims=True).astype(o_ref.dtype)


def drw_forward(e, w1, w2, *, tm=1024):
    n, f = e.shape
    assert w1.shape == (f, HIDDEN)
    assert w2.shape == (HIDDEN, 1)

    # Zero-pad hidden dim 100 -> 128 (exact: padded units are 0 after ReLU and
    # carry zero weight in w2).
    w1p = jnp.pad(w1.astype(jnp.float32), ((0, 0), (0, HIDDEN_PAD - HIDDEN)))
    w2row = jnp.pad(w2.astype(jnp.float32).T, ((0, 0), (0, HIDDEN_PAD - HIDDEN)))

    # Choose row tile and zero-pad N to a tile multiple (no divisibility assert).
    tm = _choose_row_tile(n, f, tm)
    n_pad = _round_up(n, tm)
    e_p = e.astype(jnp.float32)
    if n_pad != n:
        e_p = jnp.pad(e_p, ((0, n_pad - n), (0, 0)))

    grid = (n_pad // tm,)
    vmem_need = _vmem_estimate_bytes(tm, f)
    vmem_limit = int(min(60 * 2**20, max(32 * 2**20, 2 * vmem_need)))

    cost = pl.CostEstimate(
        flops=2 * n_pad * f * HIDDEN_PAD + 2 * n_pad * HIDDEN_PAD,
        transcendentals=0,
        bytes_accessed=n_pad * f * 4 + f * HIDDEN_PAD * 4 + HIDDEN_PAD * 4 + n_pad * 4,
    )

    out = pl.pallas_call(
        _drw_kernel,
        out_shape=jax.ShapeDtypeStruct((n_pad, 1), jnp.float32),
        grid_spec=pltpu.PrefetchScalarGridSpec(
            num_scalar_prefetch=0,
            grid=grid,
            in_specs=[
                pl.BlockSpec((tm, f), lambda i: (i, 0)),            # E row tile
                pl.BlockSpec((f, HIDDEN_PAD), lambda i: (0, 0)),    # w1 (whole)
                pl.BlockSpec((1, HIDDEN_PAD), lambda i: (0, 0)),    # w2 row (whole)
            ],
            out_specs=pl.BlockSpec((tm, 1), lambda i: (i, 0)),
        ),
        compiler_params=pltpu.CompilerParams(
            dimension_semantics=("parallel",),   # row tiles shard across TCs (v7x)
            vmem_limit_bytes=vmem_limit,
        ),
        cost_estimate=cost,
    )(e_p, w1p, w2row)

    return out[:n]


def drw_reference(e, w1, w2):
    h = jnp.maximum(e @ w1, 0.0)
    return h @ w2


if __name__ == "__main__":
    key = jax.random.PRNGKey(0)
    k_e, k_w1, k_w2 = jax.random.split(key, 3)

    num_edges = 16
    edge_features = 32

    # Deterministic parameter init matching reset_parameters():
    #   w1 ~ U(-1/sqrt(100), 1/sqrt(100)), w2 ~ U(-1/sqrt(1), 1/sqrt(1))
    stdv1 = 1.0 / math.sqrt(HIDDEN)
    stdv2 = 1.0 / math.sqrt(1)
    w1 = jax.random.uniform(k_w1, (edge_features, HIDDEN), jnp.float32,
                            minval=-stdv1, maxval=stdv1)
    w2 = jax.random.uniform(k_w2, (HIDDEN, 1), jnp.float32,
                            minval=-stdv2, maxval=stdv2)

    # TODO(synk): torch.spmm's sparse-matrix fast path is modeled with a dense
    # (N, F) matrix E; the math is identical for dense inputs.
    e = jax.random.normal(k_e, (num_edges, edge_features), jnp.float32)

    out = drw_forward(e, w1, w2)
    out = jax.block_until_ready(out)

    ref = drw_reference(e, w1, w2)
    assert out.shape == (num_edges, 1)
    assert jnp.allclose(out, ref, atol=2e-5, rtol=2e-5), "mismatch vs reference"

    print("KERNEL_OK")
</pallas_src>

<mosaic_0001>
module attributes {stable_mosaic.version = 11 : i64} {
  func.func @_drw_kernel(%arg0: i32, %arg1: memref<256x32xf32, #tpu.memory_space<vmem>>, %arg2: memref<32x128xf32, #tpu.memory_space<vmem>>, %arg3: memref<1x128xf32, #tpu.memory_space<vmem>>, %arg4: memref<256x1xf32, #tpu.memory_space<vmem>>) attributes {dimension_semantics = [#tpu.dimension_semantics<parallel>], iteration_bounds = array<i64: 1>, scalar_prefetch = 0 : i64, scratch_operands = 0 : i64, tpu.core_type = #tpu.core_type<tc>, window_params = [{transform_indices = @transform_0, window_bounds = array<i64: 256, 32>}, {pipeline_mode = #tpu.pipeline_mode<synchronous>, transform_indices = @transform_1, window_bounds = array<i64: 32, 128>}, {pipeline_mode = #tpu.pipeline_mode<synchronous>, transform_indices = @transform_2, window_bounds = array<i64: 1, 128>}, {transform_indices = @transform_3, window_bounds = array<i64: 256, 1>}]} {
    %c0 = arith.constant 0 : index
    %c0_0 = arith.constant 0 : index
    %0 = vector.load %arg1[%c0, %c0_0] : memref<256x32xf32, #tpu.memory_space<vmem>>, vector<256x32xf32>
    %c0_1 = arith.constant 0 : index
    %c0_2 = arith.constant 0 : index
    %1 = vector.load %arg2[%c0_1, %c0_2] : memref<32x128xf32, #tpu.memory_space<vmem>>, vector<32x128xf32>
    %cst = arith.constant dense<0.000000e+00> : vector<256x128xf32>
    %2 = tpu.matmul %0, %1, %cst {dimension_numbers = #tpu.dot_dimension_numbers<[1], [0], [0], [1], [0, 0, 1, 1], [], []>} : vector<256x32xf32>, vector<32x128xf32>, vector<256x128xf32> -> vector<256x128xf32>
    %cst_3 = arith.constant 0.000000e+00 : f32
    %3 = vector.broadcast %cst_3 : f32 to vector<256x128xf32>
    %4 = arith.maximumf %2, %3 : vector<256x128xf32>
    %c0_4 = arith.constant 0 : index
    %c0_5 = arith.constant 0 : index
    %5 = vector.load %arg3[%c0_4, %c0_5] : memref<1x128xf32, #tpu.memory_space<vmem>>, vector<1x128xf32>
    %6 = vector.broadcast %5 : vector<1x128xf32> to vector<256x128xf32>
    %7 = arith.mulf %4, %6 : vector<256x128xf32>
    %cst_6 = arith.constant dense<0.000000e+00> : vector<256xf32>
    %8 = vector.multi_reduction <add>, %7, %cst_6 [1] : vector<256x128xf32> to vector<256xf32>
    %9 = vector.shape_cast %8 : vector<256xf32> to vector<256x1xf32>
    %c0_7 = arith.constant 0 : index
    %c0_8 = arith.constant 0 : index
    %10 = vector.load %arg4[%c0_7, %c0_8] : memref<256x1xf32, #tpu.memory_space<vmem>>, vector<256x1xf32>
    tpu.vector_store %arg4[%c0_7, %c0_8], %9 {strides = array<i32>} : memref<256x1xf32, #tpu.memory_space<vmem>>, vector<256x1xf32>,
    return
  }
  func.func @transform_0(%arg0: i32) -> (i32, i32) {
    %c0_i32 = arith.constant 0 : i32
    %c0_i32_0 = arith.constant 0 : i32
    return %arg0, %c0_i32 : i32, i32
  }
  func.func @transform_1(%arg0: i32) -> (i32, i32) {
    %c0_i32 = arith.constant 0 : i32
    %c0_i32_0 = arith.constant 0 : i32
    %c0_i32_1 = arith.constant 0 : i32
    return %c0_i32, %c0_i32_0 : i32, i32
  }
  func.func @transform_2(%arg0: i32) -> (i32, i32) {
    %c0_i32 = arith.constant 0 : i32
    %c0_i32_0 = arith.constant 0 : i32
    %c0_i32_1 = arith.constant 0 : i32
    return %c0_i32, %c0_i32_0 : i32, i32
  }
  func.func @transform_3(%arg0: i32) -> (i32, i32) {
    %c0_i32 = arith.constant 0 : i32
    %c0_i32_0 = arith.constant 0 : i32
    return %arg0, %c0_i32 : i32, i32
  }
}

</mosaic_0001>

<llo_original>
// kernel: tpu_custom_call.1
$region0: #{tpu_custom_call.1}
  #allocation0 [shape = 'u32[]', space=smem, size = 0x4, offset = 0x4, fixed_abs, tag = 'smem constant byte address 0x4 - core index']
  #allocation1 [shape = 'u32[144,128]{1,0:T(1,128)}', space=vmem, size = 0x12000, scoped, tag = 'internal scratch']
  %s0 = inlined_call_operand.vmem [shape: f32[256,32], index: 0, kind: input, shape index: {}]
  %s1 = inlined_call_operand.vmem [shape: f32[32,128], index: 1, kind: input, shape index: {}]
  %s2 = inlined_call_operand.vmem [shape: f32[1,128], index: 2, kind: input, shape index: {}]
  %s3 = inlined_call_operand.vmem [shape: f32[256,1], index: 3, kind: output, shape index: {}]
  %s4 = sld [smem:[#allocation0]]
  $region22: #{tpu_custom_call.1} parent=0
    _
  %s6 = ssub.s32 1, %s4
  %s7 = scalar_select 0, %s6, %s4
  // Predicated region
  $region2: #{tpu_custom_call.1} parent=0 // pred_check
    _
  $region3: #{tpu_custom_call.1} parent=0 // pred_check_branch
    %9 = sbr.rel (0) target = $region5
  $region4: #{tpu_custom_call.1} parent=0 // pred_region
    _
  $region5: #{tpu_custom_call.1} parent=0 // pred_fallthru
    _
  // Predicated region
  $region6: #{tpu_custom_call.1} parent=0 // pred_check
    _
  $region7: #{tpu_custom_call.1} parent=0 // pred_check_branch
    %11 = sbr.rel (0) target = $region9
  $region8: #{tpu_custom_call.1} parent=0 // pred_region
    _
  $region9: #{tpu_custom_call.1} parent=0 // pred_fallthru
    _
  // Predicated region
  $region10: #{tpu_custom_call.1} parent=0 // pred_check
    _
  $region11: #{tpu_custom_call.1} parent=0 // pred_check_branch
    %13 = sbr.rel (0) target = $region13
  $region12: #{tpu_custom_call.1} parent=0 // pred_region
    _
  $region13: #{tpu_custom_call.1} parent=0 // pred_fallthru
    _
  %v14 = vld [vmem:[%s0] sm:$0xff]
  %v15 = vld [vmem:[%s0 + $0x8] sm:$0xff]
  %v16 = vld [vmem:[%s0 + $0x10] sm:$0xff]
  %v17 = vld [vmem:[%s0 + $0x18] sm:$0xff]
  %v18 = vld [vmem:[%s0 + $0x20] sm:$0xff]
  %v19 = vld [vmem:[%s0 + $0x28] sm:$0xff]
  %v20 = vld [vmem:[%s0 + $0x30] sm:$0xff]
  %v21 = vld [vmem:[%s0 + $0x38] sm:$0xff]
  %v22 = vld [vmem:[%s0 + $0x40] sm:$0xff]
  %v23 = vld [vmem:[%s0 + $0x48] sm:$0xff]
  %v24 = vld [vmem:[%s0 + $0x50] sm:$0xff]
  %v25 = vld [vmem:[%s0 + $0x58] sm:$0xff]
  %v26 = vld [vmem:[%s0 + $0x60] sm:$0xff]
  %v27 = vld [vmem:[%s0 + $0x68] sm:$0xff]
  %v28 = vld [vmem:[%s0 + $0x70] sm:$0xff]
  %v29 = vld [vmem:[%s0 + $0x78] sm:$0xff]
  %v30 = vld [vmem:[%s0 + $0x80] sm:$0xff]
  %v31 = vld [vmem:[%s0 + $0x88] sm:$0xff]
  %v32 = vld [vmem:[%s0 + $0x90] sm:$0xff]
  %v33 = vld [vmem:[%s0 + $0x98] sm:$0xff]
  %v34 = vld [vmem:[%s0 + $0xa0] sm:$0xff]
  %v35 = vld [vmem:[%s0 + $0xa8] sm:$0xff]
  %v36 = vld [vmem:[%s0 + $0xb0] sm:$0xff]
  %v37 = vld [vmem:[%s0 + $0xb8] sm:$0xff]
  %v38 = vld [vmem:[%s0 + $0xc0] sm:$0xff]
  %v39 = vld [vmem:[%s0 + $0xc8] sm:$0xff]
  %v40 = vld [vmem:[%s0 + $0xd0] sm:$0xff]
  %v41 = vld [vmem:[%s0 + $0xd8] sm:$0xff]
  %v42 = vld [vmem:[%s0 + $0xe0] sm:$0xff]
  %v43 = vld [vmem:[%s0 + $0xe8] sm:$0xff]
  %v44 = vld [vmem:[%s0 + $0xf0] sm:$0xff]
  %v45 = vld [vmem:[%s0 + $0xf8] sm:$0xff]
  %v46 = vld [vmem:[%s1] sm:$0xff]
  %v47 = vld [vmem:[%s1 + $0x8] sm:$0xff]
  %v48 = vld [vmem:[%s1 + $0x10] sm:$0xff]
  %v49 = vld [vmem:[%s1 + $0x18] sm:$0xff]
  %vm50 = vcmask 261120
  %v52 = vsel %vm50, %v14, 0
  %v55 = vsel %vm50, %v15, 0
  %v58 = vsel %vm50, %v16, 0
  %v61 = vsel %vm50, %v17, 0
  %v64 = vsel %vm50, %v18, 0
  %v67 = vsel %vm50, %v19, 0
  %v70 = vsel %vm50, %v20, 0
  %v73 = vsel %vm50, %v21, 0
  %v76 = vsel %vm50, %v22, 0
  %v79 = vsel %vm50, %v23, 0
  %v82 = vsel %vm50, %v24, 0
  %v85 = vsel %vm50, %v25, 0
  %v88 = vsel %vm50, %v26, 0
  %v91 = vsel %vm50, %v27, 0
  %v94 = vsel %vm50, %v28, 0
  %v97 = vsel %vm50, %v29, 0
  %v100 = vsel %vm50, %v30, 0
  %v103 = vsel %vm50, %v31, 0
  %v106 = vsel %vm50, %v32, 0
  %v109 = vsel %vm50, %v33, 0
  %v112 = vsel %vm50, %v34, 0
  %v115 = vsel %vm50, %v35, 0
  %v118 = vsel %vm50, %v36, 0
  %v121 = vsel %vm50, %v37, 0
  %v124 = vsel %vm50, %v38, 0
  %v127 = vsel %vm50, %v39, 0
  %v130 = vsel %vm50, %v40, 0
  %v133 = vsel %vm50, %v41, 0
  %v136 = vsel %vm50, %v42, 0
  %v139 = vsel %vm50, %v43, 0
  %v142 = vsel %vm50, %v44, 0
  %v145 = vsel %vm50, %v45, 0
  %147 = vmatprep.subr.mxu0 0.0
  %148 = vmatpush1.msra.mxu0 0.0
  %149 = vmatprep.subr.mxu0 0.0
  %150 = vmatpush1.msra.mxu0 0.0
  %151 = vmatprep.subr.mxu0 0.0
  %152 = vmatpush1.msra.mxu0 0.0
  %153 = vmatprep.subr.mxu0 0.0
  %154 = vmatpush1.msra.mxu0 0.0
  %155 = vmatprep.subr.mxu0 0.0
  %156 = vmatpush1.msra.mxu0 0.0
  %157 = vmatprep.subr.mxu0 0.0
  %158 = vmatpush1.msra.mxu0 0.0
  %159 = vmatprep.subr.mxu0 0.0
  %160 = vmatpush1.msra.mxu0 0.0
  %161 = vmatprep.subr.mxu0 0.0
  %162 = vmatpush1.msra.mxu0 0.0
  %163 = vmatprep.subr.mxu0 0.0
  %164 = vmatpush1.msra.mxu0 0.0
  %165 = vmatprep.subr.mxu0 0.0
  %166 = vmatpush1.msra.mxu0 0.0
  %167 = vmatprep.subr.mxu0 0.0
  %168 = vmatpush1.msra.mxu0 0.0
  %169 = vmatprep.subr.mxu0 0.0
  %170 = vmatpush1.msra.mxu0 0.0
  %171 = vmatprep.subr.mxu0 0.0
  %172 = vmatpush1.msra.mxu0 %v49
  %173 = vmatprep.subr.mxu0 0.0
  %174 = vmatpush1.msra.mxu0 %v48
  %175 = vmatprep.subr.mxu0 0.0
  %176 = vmatpush1.msra.mxu0 %v47
  %177 = vmatprep.subr.mxu0 0.0
  %178 = vmatpush1.msra.mxu0 %v46
  %179 = vmatprep.subr.mxu0 0.0
  %180 = vmatpush2.msra.mxu0 0.0
  %181 = vmatprep.subr.mxu0 0.0
  %182 = vmatpush2.msra.mxu0 0.0
  %183 = vmatprep.subr.mxu0 0.0
  %184 = vmatpush2.msra.mxu0 0.0
  %185 = vmatprep.subr.mxu0 0.0
  %186 = vmatpush2.msra.mxu0 0.0
  %187 = vmatprep.subr.mxu0 0.0
  %188 = vmatpush2.msra.mxu0 0.0
  %189 = vmatprep.subr.mxu0 0.0
  %190 = vmatpush2.msra.mxu0 0.0
  %191 = vmatprep.subr.mxu0 0.0
  %192 = vmatpush2.msra.mxu0 0.0
  %193 = vmatprep.subr.mxu0 0.0
  %194 = vmatpush2.msra.mxu0 0.0
  %195 = vmatprep.subr.mxu0 0.0
  %196 = vmatpush2.msra.mxu0 0.0
  %197 = vmatprep.subr.mxu0 0.0
  %198 = vmatpush2.msra.mxu0 0.0
  %199 = vmatprep.subr.mxu0 0.0
  %200 = vmatpush2.msra.mxu0 0.0
  %201 = vmatprep.subr.mxu0 0.0
  %202 = vmatpush2.msra.mxu0 0.0
  %203 = vmatprep.subr.mxu0 0.0
  %204 = vmatpush2.msra.mxu0 0.0
  %205 = vmatprep.subr.mxu0 0.0
  %206 = vmatpush2.msra.mxu0 0.0
  %207 = vmatprep.subr.mxu0 0.0
  %208 = vmatpush2.msra.mxu0 0.0
  %209 = vmatprep.subr.mxu0 0.0
  %210 = vmatpush2.msra.mxu0 0.0
  %211 = vmatprep.mubr.f32.mxu0 0.0
  %212 = vmatmul.mubr.f32.gmra.mxu0 %v52
  %v213 = vpop.f32.mrf.mxu0
  %v214 = vadd.f32 0.0, %v213
  %v215 = vpop.f32.mrf.mxu0
  %216 = vmatprep.mubr.f32.mxu0 0.0
  %217 = vmatmul.mubr.f32.gmra.mxu0 %v55
  %v218 = vpop.f32.mrf.mxu0
  %v219 = vadd.f32 0.0, %v218
  %v220 = vpop.f32.mrf.mxu0
  %221 = vmatprep.mubr.f32.mxu0 0.0
  %222 = vmatmul.mubr.f32.gmra.mxu0 %v58
  %v223 = vpop.f32.mrf.mxu0
  %v224 = vadd.f32 0.0, %v223
  %v225 = vpop.f32.mrf.mxu0
  %226 = vmatprep.mubr.f32.mxu0 0.0
  %227 = vmatmul.mubr.f32.gmra.mxu0 %v61
  %v228 = vpop.f32.mrf.mxu0
  %v229 = vadd.f32 0.0, %v228
  %v230 = vpop.f32.mrf.mxu0
  %231 = vmatprep.mubr.f32.mxu0 0.0
  %232 = vmatmul.mubr.f32.gmra.mxu0 %v64
  %v233 = vpop.f32.mrf.mxu0
  %v234 = vadd.f32 0.0, %v233
  %v235 = vpop.f32.mrf.mxu0
  %236 = vmatprep.mubr.f32.mxu0 0.0
  %237 = vmatmul.mubr.f32.gmra.mxu0 %v67
  %v238 = vpop.f32.mrf.mxu0
  %v239 = vadd.f32 0.0, %v238
  %v240 = vpop.f32.mrf.mxu0
  %241 = vmatprep.mubr.f32.mxu0 0.0
  %242 = vmatmul.mubr.f32.gmra.mxu0 %v70
  %v243 = vpop.f32.mrf.mxu0
  %v244 = vadd.f32 0.0, %v243
  %v245 = vpop.f32.mrf.mxu0
  %246 = vmatprep.mubr.f32.mxu0 0.0
  %247 = vmatmul.mubr.f32.gmra.mxu0 %v73
  %v248 = vpop.f32.mrf.mxu0
  %v249 = vadd.f32 0.0, %v248
  %v250 = vpop.f32.mrf.mxu0
  %251 = vmatprep.mubr.f32.mxu0 0.0
  %252 = vmatmul.mubr.f32.gmra.mxu0 %v76
  %v253 = vpop.f32.mrf.mxu0
  %v254 = vadd.f32 0.0, %v253
  %v255 = vpop.f32.mrf.mxu0
  %256 = vmatprep.mubr.f32.mxu0 0.0
  %257 = vmatmul.mubr.f32.gmra.mxu0 %v79
  %v258 = vpop.f32.mrf.mxu0
  %v259 = vadd.f32 0.0, %v258
  %v260 = vpop.f32.mrf.mxu0
  %261 = vmatprep.mubr.f32.mxu0 0.0
  %262 = vmatmul.mubr.f32.gmra.mxu0 %v82
  %v263 = vpop.f32.mrf.mxu0
  %v264 = vadd.f32 0.0, %v263
  %v265 = vpop.f32.mrf.mxu0
  %266 = vmatprep.mubr.f32.mxu0 0.0
  %267 = vmatmul.mubr.f32.gmra.mxu0 %v85
  %v268 = vpop.f32.mrf.mxu0
  %v269 = vadd.f32 0.0, %v268
  %v270 = vpop.f32.mrf.mxu0
  %271 = vmatprep.mubr.f32.mxu0 0.0
  %272 = vmatmul.mubr.f32.gmra.mxu0 %v88
  %v273 = vpop.f32.mrf.mxu0
  %v274 = vadd.f32 0.0, %v273
  %v275 = vpop.f32.mrf.mxu0
  %276 = vmatprep.mubr.f32.mxu0 0.0
  %277 = vmatmul.mubr.f32.gmra.mxu0 %v91
  %v278 = vpop.f32.mrf.mxu0
  %v279 = vadd.f32 0.0, %v278
  %v280 = vpop.f32.mrf.mxu0
  %281 = vmatprep.mubr.f32.mxu0 0.0
  %282 = vmatmul.mubr.f32.gmra.mxu0 %v94
  %v283 = vpop.f32.mrf.mxu0
  %v284 = vadd.f32 0.0, %v283
  %v285 = vpop.f32.mrf.mxu0
  %286 = vmatprep.mubr.f32.mxu0 0.0
  %287 = vmatmul.mubr.f32.gmra.mxu0 %v97
  %v288 = vpop.f32.mrf.mxu0
  %v289 = vadd.f32 0.0, %v288
  %v290 = vpop.f32.mrf.mxu0
  %291 = vmatprep.mubr.f32.mxu0 0.0
  %292 = vmatmul.mubr.f32.gmra.mxu0 %v100
  %v293 = vpop.f32.mrf.mxu0
  %v294 = vadd.f32 0.0, %v293
  %v295 = vpop.f32.mrf.mxu0
  %296 = vmatprep.mubr.f32.mxu0 0.0
  %297 = vmatmul.mubr.f32.gmra.mxu0 %v103
  %v298 = vpop.f32.mrf.mxu0
  %v299 = vadd.f32 0.0, %v298
  %v300 = vpop.f32.mrf.mxu0
  %301 = vmatprep.mubr.f32.mxu0 0.0
  %302 = vmatmul.mubr.f32.gmra.mxu0 %v106
  %v303 = vpop.f32.mrf.mxu0
  %v304 = vadd.f32 0.0, %v303
  %v305 = vpop.f32.mrf.mxu0
  %306 = vmatprep.mubr.f32.mxu0 0.0
  %307 = vmatmul.mubr.f32.gmra.mxu0 %v109
  %v308 = vpop.f32.mrf.mxu0
  %v309 = vadd.f32 0.0, %v308
  %v310 = vpop.f32.mrf.mxu0
  %311 = vmatprep.mubr.f32.mxu0 0.0
  %312 = vmatmul.mubr.f32.gmra.mxu0 %v112
  %v313 = vpop.f32.mrf.mxu0
  %v314 = vadd.f32 0.0, %v313
  %v315 = vpop.f32.mrf.mxu0
  %316 = vmatprep.mubr.f32.mxu0 0.0
  %317 = vmatmul.mubr.f32.gmra.mxu0 %v115
  %v318 = vpop.f32.mrf.mxu0
  %v319 = vadd.f32 0.0, %v318
  %v320 = vpop.f32.mrf.mxu0
  %321 = vmatprep.mubr.f32.mxu0 0.0
  %322 = vmatmul.mubr.f32.gmra.mxu0 %v118
  %v323 = vpop.f32.mrf.mxu0
  %v324 = vadd.f32 0.0, %v323
  %v325 = vpop.f32.mrf.mxu0
  %326 = vmatprep.mubr.f32.mxu0 0.0
  %327 = vmatmul.mubr.f32.gmra.mxu0 %v121
  %v328 = vpop.f32.mrf.mxu0
  %v329 = vadd.f32 0.0, %v328
  %v330 = vpop.f32.mrf.mxu0
  %331 = vmatprep.mubr.f32.mxu0 0.0
  %332 = vmatmul.mubr.f32.gmra.mxu0 %v124
  %v333 = vpop.f32.mrf.mxu0
  %v334 = vadd.f32 0.0, %v333
  %v335 = vpop.f32.mrf.mxu0
  %336 = vmatprep.mubr.f32.mxu0 0.0
  %337 = vmatmul.mubr.f32.gmra.mxu0 %v127
  %v338 = vpop.f32.mrf.mxu0
  %v339 = vadd.f32 0.0, %v338
  %v340 = vpop.f32.mrf.mxu0
  %341 = vmatprep.mubr.f32.mxu0 0.0
  %342 = vmatmul.mubr.f32.gmra.mxu0 %v130
  %v343 = vpop.f32.mrf.mxu0
  %v344 = vadd.f32 0.0, %v343
  %v345 = vpop.f32.mrf.mxu0
  %346 = vmatprep.mubr.f32.mxu0 0.0
  %347 = vmatmul.mubr.f32.gmra.mxu0 %v133
  %v348 = vpop.f32.mrf.mxu0
  %v349 = vadd.f32 0.0, %v348
  %v350 = vpop.f32.mrf.mxu0
  %351 = vmatprep.mubr.f32.mxu0 0.0
  %352 = vmatmul.mubr.f32.gmra.mxu0 %v136
  %v353 = vpop.f32.mrf.mxu0
  %v354 = vadd.f32 0.0, %v353
  %v355 = vpop.f32.mrf.mxu0
  %356 = vmatprep.mubr.f32.mxu0 0.0
  %357 = vmatmul.mubr.f32.gmra.mxu0 %v139
  %v358 = vpop.f32.mrf.mxu0
  %v359 = vadd.f32 0.0, %v358
  %v360 = vpop.f32.mrf.mxu0
  %361 = vmatprep.mubr.f32.mxu0 0.0
  %362 = vmatmul.mubr.f32.gmra.mxu0 %v142
  %v363 = vpop.f32.mrf.mxu0
  %v364 = vadd.f32 0.0, %v363
  %v365 = vpop.f32.mrf.mxu0
  %366 = vmatprep.mubr.f32.mxu0 0.0
  %367 = vmatmul.mubr.f32.gmra.mxu0 %v145
  %v368 = vpop.f32.mrf.mxu0
  %v369 = vadd.f32 0.0, %v368
  %v370 = vpop.f32.mrf.mxu0
  %371 = vdwg.mxu0
  %v372 = vmax.f32 %v214, 0.0
  %v373 = vmax.f32 %v219, 0.0
  %v374 = vmax.f32 %v224, 0.0
  %v375 = vmax.f32 %v229, 0.0
  %v376 = vmax.f32 %v234, 0.0
  %v377 = vmax.f32 %v239, 0.0
  %v378 = vmax.f32 %v244, 0.0
  %v379 = vmax.f32 %v249, 0.0
  %v380 = vmax.f32 %v254, 0.0
  %v381 = vmax.f32 %v259, 0.0
  %v382 = vmax.f32 %v264, 0.0
  %v383 = vmax.f32 %v269, 0.0
  %v384 = vmax.f32 %v274, 0.0
  %v385 = vmax.f32 %v279, 0.0
  %v386 = vmax.f32 %v284, 0.0
  %v387 = vmax.f32 %v289, 0.0
  %v388 = vmax.f32 %v294, 0.0
  %v389 = vmax.f32 %v299, 0.0
  %v390 = vmax.f32 %v304, 0.0
  %v391 = vmax.f32 %v309, 0.0
  %v392 = vmax.f32 %v314, 0.0
  %v393 = vmax.f32 %v319, 0.0
  %v394 = vmax.f32 %v324, 0.0
  %v395 = vmax.f32 %v329, 0.0
  %v396 = vmax.f32 %v334, 0.0
  %v397 = vmax.f32 %v339, 0.0
  %v398 = vmax.f32 %v344, 0.0
  %v399 = vmax.f32 %v349, 0.0
  %v400 = vmax.f32 %v354, 0.0
  %v401 = vmax.f32 %v359, 0.0
  %v402 = vmax.f32 %v364, 0.0
  %v403 = vmax.f32 %v369, 0.0
  %v404 = vld [vmem:[%s2] sm:$0x1]
  %v406 = vlaneseq
  %v407 = vshrl.u32 %v406, 7
  %v408 = vsub.s32 0, %v407
  %v409 = vrot.slane %v404, %v408
  %v411 = vmul.f32 %v372, %v409
  %v412 = vmul.f32 %v373, %v409
  %v413 = vmul.f32 %v374, %v409
  %v414 = vmul.f32 %v375, %v409
  %v415 = vmul.f32 %v376, %v409
  %v416 = vmul.f32 %v377, %v409
  %v417 = vmul.f32 %v378, %v409
  %v418 = vmul.f32 %v379, %v409
  %v419 = vmul.f32 %v380, %v409
  %v420 = vmul.f32 %v381, %v409
  %v421 = vmul.f32 %v382, %v409
  %v422 = vmul.f32 %v383, %v409
  %v423 = vmul.f32 %v384, %v409
  %v424 = vmul.f32 %v385, %v409
  %v425 = vmul.f32 %v386, %v409
  %v426 = vmul.f32 %v387, %v409
  %v427 = vmul.f32 %v388, %v409
  %v428 = vmul.f32 %v389, %v409
  %v429 = vmul.f32 %v390, %v409
  %v430 = vmul.f32 %v391, %v409
  %v431 = vmul.f32 %v392, %v409
  %v432 = vmul.f32 %v393, %v409
  %v433 = vmul.f32 %v394, %v409
  %v434 = vmul.f32 %v395, %v409
  %v435 = vmul.f32 %v396, %v409
  %v436 = vmul.f32 %v397, %v409
  %v437 = vmul.f32 %v398, %v409
  %v438 = vmul.f32 %v399, %v409
  %v439 = vmul.f32 %v400, %v409
  %v440 = vmul.f32 %v401, %v409
  %v441 = vmul.f32 %v402, %v409
  %v442 = vmul.f32 %v403, %v409
  %443 = vadd.xlane.f32.xlu0 %v411
  %v444 = vpop.xlane.xlu0 %443
  %445 = vadd.xlane.f32.xlu0 %v412
  %v446 = vpop.xlane.xlu0 %445
  %447 = vadd.xlane.f32.xlu0 %v413
  %v448 = vpop.xlane.xlu0 %447
  %449 = vadd.xlane.f32.xlu0 %v414
  %v450 = vpop.xlane.xlu0 %449
  %451 = vadd.xlane.f32.xlu0 %v415
  %v452 = vpop.xlane.xlu0 %451
  %453 = vadd.xlane.f32.xlu0 %v416
  %v454 = vpop.xlane.xlu0 %453
  %455 = vadd.xlane.f32.xlu0 %v417
  %v456 = vpop.xlane.xlu0 %455
  %457 = vadd.xlane.f32.xlu0 %v418
  %v458 = vpop.xlane.xlu0 %457
  %459 = vadd.xlane.f32.xlu0 %v419
  %v460 = vpop.xlane.xlu0 %459
  %461 = vadd.xlane.f32.xlu0 %v420
  %v462 = vpop.xlane.xlu0 %461
  %463 = vadd.xlane.f32.xlu0 %v421
  %v464 = vpop.xlane.xlu0 %463
  %465 = vadd.xlane.f32.xlu0 %v422
  %v466 = vpop.xlane.xlu0 %465
  %467 = vadd.xlane.f32.xlu0 %v423
  %v468 = vpop.xlane.xlu0 %467
  %469 = vadd.xlane.f32.xlu0 %v424
  %v470 = vpop.xlane.xlu0 %469
  %471 = vadd.xlane.f32.xlu0 %v425
  %v472 = vpop.xlane.xlu0 %471
  %473 = vadd.xlane.f32.xlu0 %v426
  %v474 = vpop.xlane.xlu0 %473
  %475 = vadd.xlane.f32.xlu0 %v427
  %v476 = vpop.xlane.xlu0 %475
  %477 = vadd.xlane.f32.xlu0 %v428
  %v478 = vpop.xlane.xlu0 %477
  %479 = vadd.xlane.f32.xlu0 %v429
  %v480 = vpop.xlane.xlu0 %479
  %481 = vadd.xlane.f32.xlu0 %v430
  %v482 = vpop.xlane.xlu0 %481
  %483 = vadd.xlane.f32.xlu0 %v431
  %v484 = vpop.xlane.xlu0 %483
  %485 = vadd.xlane.f32.xlu0 %v432
  %v486 = vpop.xlane.xlu0 %485
  %487 = vadd.xlane.f32.xlu0 %v433
  %v488 = vpop.xlane.xlu0 %487
  %489 = vadd.xlane.f32.xlu0 %v434
  %v490 = vpop.xlane.xlu0 %489
  %491 = vadd.xlane.f32.xlu0 %v435
  %v492 = vpop.xlane.xlu0 %491
  %493 = vadd.xlane.f32.xlu0 %v436
  %v494 = vpop.xlane.xlu0 %493
  %495 = vadd.xlane.f32.xlu0 %v437
  %v496 = vpop.xlane.xlu0 %495
  %497 = vadd.xlane.f32.xlu0 %v438
  %v498 = vpop.xlane.xlu0 %497
  %499 = vadd.xlane.f32.xlu0 %v439
  %v500 = vpop.xlane.xlu0 %499
  %501 = vadd.xlane.f32.xlu0 %v440
  %v502 = vpop.xlane.xlu0 %501
  %503 = vadd.xlane.f32.xlu0 %v441
  %v504 = vpop.xlane.xlu0 %503
  %505 = vadd.xlane.f32.xlu0 %v442
  %v506 = vpop.xlane.xlu0 %505
  %vm507 = vcmask 7168
  %508 = vst.msk [vmem:[%s3] sm:$0xff] %vm507, %v444
  %509 = vst.msk [vmem:[%s3 + $0x8] sm:$0xff] %vm507, %v446
  %510 = vst.msk [vmem:[%s3 + $0x10] sm:$0xff] %vm507, %v448
  %511 = vst.msk [vmem:[%s3 + $0x18] sm:$0xff] %vm507, %v450
  %512 = vst.msk [vmem:[%s3 + $0x20] sm:$0xff] %vm507, %v452
  %513 = vst.msk [vmem:[%s3 + $0x28] sm:$0xff] %vm507, %v454
  %514 = vst.msk [vmem:[%s3 + $0x30] sm:$0xff] %vm507, %v456
  %515 = vst.msk [vmem:[%s3 + $0x38] sm:$0xff] %vm507, %v458
  %516 = vst.msk [vmem:[%s3 + $0x40] sm:$0xff] %vm507, %v460
  %517 = vst.msk [vmem:[%s3 + $0x48] sm:$0xff] %vm507, %v462
  %518 = vst.msk [vmem:[%s3 + $0x50] sm:$0xff] %vm507, %v464
  %519 = vst.msk [vmem:[%s3 + $0x58] sm:$0xff] %vm507, %v466
  %520 = vst.msk [vmem:[%s3 + $0x60] sm:$0xff] %vm507, %v468
  %521 = vst.msk [vmem:[%s3 + $0x68] sm:$0xff] %vm507, %v470
  %522 = vst.msk [vmem:[%s3 + $0x70] sm:$0xff] %vm507, %v472
  %523 = vst.msk [vmem:[%s3 + $0x78] sm:$0xff] %vm507, %v474
  %524 = vst.msk [vmem:[%s3 + $0x80] sm:$0xff] %vm507, %v476
  %525 = vst.msk [vmem:[%s3 + $0x88] sm:$0xff] %vm507, %v478
  %526 = vst.msk [vmem:[%s3 + $0x90] sm:$0xff] %vm507, %v480
  %527 = vst.msk [vmem:[%s3 + $0x98] sm:$0xff] %vm507, %v482
  %528 = vst.msk [vmem:[%s3 + $0xa0] sm:$0xff] %vm507, %v484
  %529 = vst.msk [vmem:[%s3 + $0xa8] sm:$0xff] %vm507, %v486
  %530 = vst.msk [vmem:[%s3 + $0xb0] sm:$0xff] %vm507, %v488
  %531 = vst.msk [vmem:[%s3 + $0xb8] sm:$0xff] %vm507, %v490
  %532 = vst.msk [vmem:[%s3 + $0xc0] sm:$0xff] %vm507, %v492
  %533 = vst.msk [vmem:[%s3 + $0xc8] sm:$0xff] %vm507, %v494
  %534 = vst.msk [vmem:[%s3 + $0xd0] sm:$0xff] %vm507, %v496
  %535 = vst.msk [vmem:[%s3 + $0xd8] sm:$0xff] %vm507, %v498
  %536 = vst.msk [vmem:[%s3 + $0xe0] sm:$0xff] %vm507, %v500
  %537 = vst.msk [vmem:[%s3 + $0xe8] sm:$0xff] %vm507, %v502
  %538 = vst.msk [vmem:[%s3 + $0xf0] sm:$0xff] %vm507, %v504
  %539 = vst.msk [vmem:[%s3 + $0xf8] sm:$0xff] %vm507, %v506
  // Predicated region
  $region14: #{tpu_custom_call.1} parent=0 // pred_check
    _
  $region15: #{tpu_custom_call.1} parent=0 // pred_check_branch
    %541 = sbr.rel (0) target = $region17
  $region16: #{tpu_custom_call.1} parent=0 // pred_region
    _
  $region17: #{tpu_custom_call.1} parent=0 // pred_fallthru
    _
  // Predicated region
  $region18: #{tpu_custom_call.1} parent=0 // pred_check
    _
  $region19: #{tpu_custom_call.1} parent=0 // pred_check_branch
    %543 = sbr.rel (0) target = $region21
  $region20: #{tpu_custom_call.1} parent=0 // pred_region
    _
  $region21: #{tpu_custom_call.1} parent=0 // pred_fallthru
    _

</llo_original>
